<compile_context>
chip_gen: v5e
topology: v5e:2x2
jax: 0.10.0
libtpu: 0.0.40
codegen_flags: <defaults>
</compile_context>

<pallas_src>
import math
import functools

import jax
import jax.numpy as jnp
from jax.experimental import pallas as pl
from jax.experimental.pallas import tpu as pltpu


def _mha_kernel(x_ref, wqkv_ref, bqkv_ref, wo_ref, bo_ref, o_ref, *,
                num_heads, head_dim, seq_len, batch_tile):
    H, Dh, S, bb = num_heads, head_dim, seq_len, batch_tile
    E = H * Dh
    rows = bb * S

    x = x_ref[...]          # (rows, E)  bf16
    wqkv = wqkv_ref[...]    # (E, 3E)    bf16, pre-transposed: y = x @ Wqkv
    wo = wo_ref[...]        # (E, E)     bf16, pre-transposed

    # Fused Q/K/V projection: one MXU contraction, f32 accumulation.
    # The 1/sqrt(Dh) scale is already folded into the Q columns of wqkv/bqkv.
    qkv = jnp.dot(x, wqkv, preferred_element_type=jnp.float32) + bqkv_ref[...]

    acc = jnp.zeros((rows, E), jnp.float32)

    # Heads are contiguous Dh-wide column groups of q/k/v.  The short head
    # loop is unrolled; each iteration is batched over the batch tile via a
    # single-batch-dim einsum (no explicit transposes anywhere).
    for h in range(H):
        q = qkv[:, h * Dh:(h + 1) * Dh]
        k = qkv[:, E + h * Dh:E + (h + 1) * Dh]
        v = qkv[:, 2 * E + h * Dh:2 * E + (h + 1) * Dh]

        # Leading-dim split only (lane dim untouched) -> cheap.
        qb = q.reshape(bb, S, Dh).astype(jnp.bfloat16)
        kb = k.reshape(bb, S, Dh).astype(jnp.bfloat16)
        vb = v.reshape(bb, S, Dh).astype(jnp.bfloat16)

        # Scores: contraction over Dh; no k transpose needed.
        s = jnp.einsum("bqd,bkd->bqk", qb, kb,
                       preferred_element_type=jnp.float32)
        # dropout(attention_scores): identity in eval mode.

        # Softmax in f32; denominator via the EUP approximate reciprocal.
        s = s - jnp.max(s, axis=-1, keepdims=True)
        p = jnp.exp(s)
        p = p * pl.reciprocal(jnp.sum(p, axis=-1, keepdims=True), approx=True)

        o = jnp.einsum("bqk,bkd->bqd", p.astype(jnp.bfloat16), vb,
                       preferred_element_type=jnp.float32)       # (bb, S, Dh)

        # Fused "concat heads + out_linear":
        #   concat_h(o_h) @ Wo^T == sum_h o_h @ Wo^T[h*Dh:(h+1)*Dh, :]
        acc = acc + jnp.dot(o.reshape(rows, Dh).astype(jnp.bfloat16),
                            wo[h * Dh:(h + 1) * Dh, :],
                            preferred_element_type=jnp.float32)

    o_ref[...] = acc + bo_ref[...]


def multi_headed_attention(x, params, *, num_heads, batch_tile=None):
    """x: (B, S, E) float32.  params: PyTorch-style (E,E) weights, (1,E) biases."""
    B, S, E = x.shape
    assert E % num_heads == 0
    head_dim = E // num_heads
    bb = B if batch_tile is None else batch_tile
    assert B % bb == 0 and (bb * S) % 8 == 0
    rows = bb * S

    # Host-side (fused by XLA with the concat/transpose it already does):
    #   * fold the attention scale into Wq / bq,
    #   * fuse + pre-transpose weights so the kernel computes x @ W directly,
    #   * cast MXU operands to bf16.
    scale = 1.0 / math.sqrt(head_dim)
    wqkv_t = jnp.concatenate(
        [params["wq"] * scale, params["wk"], params["wv"]],
        axis=0).T.astype(jnp.bfloat16)                                   # (E, 3E)
    bqkv = jnp.concatenate(
        [params["bq"] * scale, params["bk"], params["bv"]],
        axis=-1).astype(jnp.float32)                                     # (1, 3E)
    wo_t = params["wo"].T.astype(jnp.bfloat16)                           # (E, E)
    bo = params["bo"].astype(jnp.float32)                                # (1, E)

    x2 = x.reshape(B * S, E).astype(jnp.bfloat16)

    kernel = functools.partial(_mha_kernel, num_heads=num_heads,
                               head_dim=head_dim, seq_len=S, batch_tile=bb)

    const = lambda i: (0, 0)
    # NOTE(v7x): at realistic E (512-1024), mark the constant-index weight
    # specs pipeline_mode=pl.Buffered(1) and set vmem_limit_bytes explicitly
    # to fit the 64 MiB per-TC VMEM; unnecessary at E=32.
    out2 = pl.pallas_call(
        kernel,
        out_shape=jax.ShapeDtypeStruct((B * S, E), jnp.float32),
        grid_spec=pltpu.PrefetchScalarGridSpec(
            num_scalar_prefetch=0,
            grid=(B // bb,),
            in_specs=[
                pl.BlockSpec((rows, E), lambda i: (i, 0)),   # x rows for this batch tile
                pl.BlockSpec((E, 3 * E), const),             # fused QKV weight (pre-T, pre-scaled Q)
                pl.BlockSpec((1, 3 * E), const),             # fused QKV bias (pre-scaled Q)
                pl.BlockSpec((E, E), const),                 # out weight (pre-T)
                pl.BlockSpec((1, E), const),                 # out bias
            ],
            out_specs=pl.BlockSpec((rows, E), lambda i: (i, 0)),
        ),
        compiler_params=pltpu.CompilerParams(
            dimension_semantics=("parallel",),   # batch tiles are independent
        ),
    )(x2, wqkv_t, bqkv, wo_t, bo)

    return out2.reshape(B, S, E)


def _reference(x, params, *, num_heads):
    """Pure-JAX f32 reference mirroring the PyTorch forward (eval mode)."""
    B, S, E = x.shape
    Dh = E // num_heads
    scale = 1.0 / math.sqrt(Dh)

    def lin(a, w, b):
        return a @ w.T + b

    q = lin(x, params["wq"], params["bq"])
    k = lin(x, params["wk"], params["bk"])
    v = lin(x, params["wv"], params["bv"])

    def split(a):  # (B,S,E) -> (B,H,S,Dh)
        return a.reshape(B, S, num_heads, Dh).transpose(0, 2, 1, 3)

    q, k, v = split(q), split(k), split(v)
    scores = jnp.einsum("bhqd,bhkd->bhqk", q, k) * scale
    w = jax.nn.softmax(scores, axis=-1)
    o = jnp.einsum("bhqk,bhkd->bhqd", w, v)
    o = o.transpose(0, 2, 1, 3).reshape(B, S, E)
    return lin(o, params["wo"], params["bo"])


def _init_params(key, embed_dim):
    """Deterministic PyTorch-Linear-style init (uniform +/- 1/sqrt(fan_in))."""
    bound = 1.0 / math.sqrt(embed_dim)
    keys = jax.random.split(key, 8)
    p = {}
    for i, n in enumerate(["q", "k", "v", "o"]):
        p[f"w{n}"] = jax.random.uniform(
            keys[2 * i], (embed_dim, embed_dim), jnp.float32, -bound, bound)
        p[f"b{n}"] = jax.random.uniform(
            keys[2 * i + 1], (1, embed_dim), jnp.float32, -bound, bound)
    return p


if __name__ == "__main__":
    num_heads = 4
    embed_dim = 32
    batch, seq = 2, 8

    key = jax.random.PRNGKey(0)
    kx, kp = jax.random.split(key)
    x = jax.random.normal(kx, (batch, seq, embed_dim), jnp.float32)
    params = _init_params(kp, embed_dim)

    out = multi_headed_attention(x, params, num_heads=num_heads)
    out = jax.block_until_ready(out)

    ref = _reference(x, params, num_heads=num_heads)
    assert out.shape == (batch, seq, embed_dim)
    # bf16 matmul inputs with f32 accumulation -> loosened tolerance vs f32 ref.
    assert jnp.allclose(out, ref, atol=5e-2, rtol=5e-2), "mismatch vs reference"

    print("KERNEL_OK")
</pallas_src>

<mosaic_0001>
module attributes {stable_mosaic.version = 11 : i64} {
  func.func @_mha_kernel(%arg0: i32, %arg1: memref<16x32xbf16, #tpu.memory_space<vmem>>, %arg2: memref<32x96xbf16, #tpu.memory_space<vmem>>, %arg3: memref<1x96xf32, #tpu.memory_space<vmem>>, %arg4: memref<32x32xbf16, #tpu.memory_space<vmem>>, %arg5: memref<1x32xf32, #tpu.memory_space<vmem>>, %arg6: memref<16x32xf32, #tpu.memory_space<vmem>>) attributes {dimension_semantics = [#tpu.dimension_semantics<parallel>], iteration_bounds = array<i64: 1>, scalar_prefetch = 0 : i64, scratch_operands = 0 : i64, tpu.core_type = #tpu.core_type<tc>, window_params = [{transform_indices = @transform_0, window_bounds = array<i64: 16, 32>}, {pipeline_mode = #tpu.pipeline_mode<synchronous>, transform_indices = @transform_1, window_bounds = array<i64: 32, 96>}, {pipeline_mode = #tpu.pipeline_mode<synchronous>, transform_indices = @transform_2, window_bounds = array<i64: 1, 96>}, {pipeline_mode = #tpu.pipeline_mode<synchronous>, transform_indices = @transform_3, window_bounds = array<i64: 32, 32>}, {pipeline_mode = #tpu.pipeline_mode<synchronous>, transform_indices = @transform_4, window_bounds = array<i64: 1, 32>}, {transform_indices = @transform_5, window_bounds = array<i64: 16, 32>}]} {
    %c0 = arith.constant 0 : index
    %c0_0 = arith.constant 0 : index
    %0 = vector.load %arg1[%c0, %c0_0] : memref<16x32xbf16, #tpu.memory_space<vmem>>, vector<16x32xbf16>
    %c0_1 = arith.constant 0 : index
    %c0_2 = arith.constant 0 : index
    %1 = vector.load %arg2[%c0_1, %c0_2] : memref<32x96xbf16, #tpu.memory_space<vmem>>, vector<32x96xbf16>
    %c0_3 = arith.constant 0 : index
    %c0_4 = arith.constant 0 : index
    %2 = vector.load %arg4[%c0_3, %c0_4] : memref<32x32xbf16, #tpu.memory_space<vmem>>, vector<32x32xbf16>
    %cst = arith.constant dense<0.000000e+00> : vector<16x96xf32>
    %3 = tpu.matmul %0, %1, %cst {dimension_numbers = #tpu.dot_dimension_numbers<[1], [0], [0], [1], [0, 0, 1, 1], [], []>} : vector<16x32xbf16>, vector<32x96xbf16>, vector<16x96xf32> -> vector<16x96xf32>
    %c0_5 = arith.constant 0 : index
    %c0_6 = arith.constant 0 : index
    %4 = vector.load %arg3[%c0_5, %c0_6] : memref<1x96xf32, #tpu.memory_space<vmem>>, vector<1x96xf32>
    %5 = vector.broadcast %4 : vector<1x96xf32> to vector<16x96xf32>
    %6 = arith.addf %3, %5 : vector<16x96xf32>
    %cst_7 = arith.constant 0.000000e+00 : f32
    %7 = vector.broadcast %cst_7 : f32 to vector<16x32xf32>
    %8 = vector.extract_strided_slice %6 {offsets = [0, 0], sizes = [16, 8], strides = [1, 1]} : vector<16x96xf32> to vector<16x8xf32>
    %9 = vector.extract_strided_slice %6 {offsets = [0, 32], sizes = [16, 8], strides = [1, 1]} : vector<16x96xf32> to vector<16x8xf32>
    %10 = vector.extract_strided_slice %6 {offsets = [0, 64], sizes = [16, 8], strides = [1, 1]} : vector<16x96xf32> to vector<16x8xf32>
    %11 = vector.shape_cast %8 : vector<16x8xf32> to vector<2x8x8xf32>
    %12 = arith.truncf %11 : vector<2x8x8xf32> to vector<2x8x8xbf16>
    %13 = vector.shape_cast %9 : vector<16x8xf32> to vector<2x8x8xf32>
    %14 = arith.truncf %13 : vector<2x8x8xf32> to vector<2x8x8xbf16>
    %15 = vector.shape_cast %10 : vector<16x8xf32> to vector<2x8x8xf32>
    %16 = arith.truncf %15 : vector<2x8x8xf32> to vector<2x8x8xbf16>
    "tpu.trace_start"() <{level = 10 : i32, message = "bqd,bkd->bqk"}> : () -> ()
    %cst_8 = arith.constant dense<0.000000e+00> : vector<2x8x8xf32>
    %17 = tpu.matmul %12, %14, %cst_8 {dimension_numbers = #tpu.dot_dimension_numbers<[2], [2], [1], [1], [0, 0, 0, 1, 1, 1], [0], [0]>} : vector<2x8x8xbf16>, vector<2x8x8xbf16>, vector<2x8x8xf32> -> vector<2x8x8xf32>
    "tpu.trace_stop"() : () -> ()
    %cst_9 = arith.constant dense<0xFF800000> : vector<2x8xf32>
    %18 = vector.multi_reduction <maximumf>, %17, %cst_9 [2] : vector<2x8x8xf32> to vector<2x8xf32>
    %19 = vector.shape_cast %18 : vector<2x8xf32> to vector<2x8x1xf32>
    %20 = vector.broadcast %19 : vector<2x8x1xf32> to vector<2x8x8xf32>
    %21 = arith.subf %17, %20 : vector<2x8x8xf32>
    %22 = math.exp %21 : vector<2x8x8xf32>
    %cst_10 = arith.constant dense<0.000000e+00> : vector<2x8xf32>
    %23 = vector.multi_reduction <add>, %22, %cst_10 [2] : vector<2x8x8xf32> to vector<2x8xf32>
    %24 = vector.shape_cast %23 : vector<2x8xf32> to vector<2x8x1xf32>
    %25 = tpu.reciprocal %24 {approx = true} : vector<2x8x1xf32> -> vector<2x8x1xf32>
    %26 = vector.broadcast %25 : vector<2x8x1xf32> to vector<2x8x8xf32>
    %27 = arith.mulf %22, %26 : vector<2x8x8xf32>
    %28 = arith.truncf %27 : vector<2x8x8xf32> to vector<2x8x8xbf16>
    "tpu.trace_start"() <{level = 10 : i32, message = "bqk,bkd->bqd"}> : () -> ()
    %cst_11 = arith.constant dense<0.000000e+00> : vector<2x8x8xf32>
    %29 = tpu.matmul %28, %16, %cst_11 {dimension_numbers = #tpu.dot_dimension_numbers<[2], [1], [1], [2], [0, 0, 0, 1, 1, 2], [0], [0]>} : vector<2x8x8xbf16>, vector<2x8x8xbf16>, vector<2x8x8xf32> -> vector<2x8x8xf32>
    "tpu.trace_stop"() : () -> ()
    %30 = vector.shape_cast %29 : vector<2x8x8xf32> to vector<16x8xf32>
    %31 = arith.truncf %30 : vector<16x8xf32> to vector<16x8xbf16>
    %32 = vector.extract_strided_slice %2 {offsets = [0, 0], sizes = [8, 32], strides = [1, 1]} : vector<32x32xbf16> to vector<8x32xbf16>
    %cst_12 = arith.constant dense<0.000000e+00> : vector<16x32xf32>
    %33 = tpu.matmul %31, %32, %cst_12 {dimension_numbers = #tpu.dot_dimension_numbers<[1], [0], [0], [1], [0, 0, 1, 1], [], []>} : vector<16x8xbf16>, vector<8x32xbf16>, vector<16x32xf32> -> vector<16x32xf32>
    %34 = arith.addf %7, %33 : vector<16x32xf32>
    %35 = vector.extract_strided_slice %6 {offsets = [0, 8], sizes = [16, 8], strides = [1, 1]} : vector<16x96xf32> to vector<16x8xf32>
    %36 = vector.extract_strided_slice %6 {offsets = [0, 40], sizes = [16, 8], strides = [1, 1]} : vector<16x96xf32> to vector<16x8xf32>
    %37 = vector.extract_strided_slice %6 {offsets = [0, 72], sizes = [16, 8], strides = [1, 1]} : vector<16x96xf32> to vector<16x8xf32>
    %38 = vector.shape_cast %35 : vector<16x8xf32> to vector<2x8x8xf32>
    %39 = arith.truncf %38 : vector<2x8x8xf32> to vector<2x8x8xbf16>
    %40 = vector.shape_cast %36 : vector<16x8xf32> to vector<2x8x8xf32>
    %41 = arith.truncf %40 : vector<2x8x8xf32> to vector<2x8x8xbf16>
    %42 = vector.shape_cast %37 : vector<16x8xf32> to vector<2x8x8xf32>
    %43 = arith.truncf %42 : vector<2x8x8xf32> to vector<2x8x8xbf16>
    "tpu.trace_start"() <{level = 10 : i32, message = "bqd,bkd->bqk"}> : () -> ()
    %cst_13 = arith.constant dense<0.000000e+00> : vector<2x8x8xf32>
    %44 = tpu.matmul %39, %41, %cst_13 {dimension_numbers = #tpu.dot_dimension_numbers<[2], [2], [1], [1], [0, 0, 0, 1, 1, 1], [0], [0]>} : vector<2x8x8xbf16>, vector<2x8x8xbf16>, vector<2x8x8xf32> -> vector<2x8x8xf32>
    "tpu.trace_stop"() : () -> ()
    %cst_14 = arith.constant dense<0xFF800000> : vector<2x8xf32>
    %45 = vector.multi_reduction <maximumf>, %44, %cst_14 [2] : vector<2x8x8xf32> to vector<2x8xf32>
    %46 = vector.shape_cast %45 : vector<2x8xf32> to vector<2x8x1xf32>
    %47 = vector.broadcast %46 : vector<2x8x1xf32> to vector<2x8x8xf32>
    %48 = arith.subf %44, %47 : vector<2x8x8xf32>
    %49 = math.exp %48 : vector<2x8x8xf32>
    %cst_15 = arith.constant dense<0.000000e+00> : vector<2x8xf32>
    %50 = vector.multi_reduction <add>, %49, %cst_15 [2] : vector<2x8x8xf32> to vector<2x8xf32>
    %51 = vector.shape_cast %50 : vector<2x8xf32> to vector<2x8x1xf32>
    %52 = tpu.reciprocal %51 {approx = true} : vector<2x8x1xf32> -> vector<2x8x1xf32>
    %53 = vector.broadcast %52 : vector<2x8x1xf32> to vector<2x8x8xf32>
    %54 = arith.mulf %49, %53 : vector<2x8x8xf32>
    %55 = arith.truncf %54 : vector<2x8x8xf32> to vector<2x8x8xbf16>
    "tpu.trace_start"() <{level = 10 : i32, message = "bqk,bkd->bqd"}> : () -> ()
    %cst_16 = arith.constant dense<0.000000e+00> : vector<2x8x8xf32>
    %56 = tpu.matmul %55, %43, %cst_16 {dimension_numbers = #tpu.dot_dimension_numbers<[2], [1], [1], [2], [0, 0, 0, 1, 1, 2], [0], [0]>} : vector<2x8x8xbf16>, vector<2x8x8xbf16>, vector<2x8x8xf32> -> vector<2x8x8xf32>
    "tpu.trace_stop"() : () -> ()
    %57 = vector.shape_cast %56 : vector<2x8x8xf32> to vector<16x8xf32>
    %58 = arith.truncf %57 : vector<16x8xf32> to vector<16x8xbf16>
    %59 = vector.extract_strided_slice %2 {offsets = [8, 0], sizes = [8, 32], strides = [1, 1]} : vector<32x32xbf16> to vector<8x32xbf16>
    %cst_17 = arith.constant dense<0.000000e+00> : vector<16x32xf32>
    %60 = tpu.matmul %58, %59, %cst_17 {dimension_numbers = #tpu.dot_dimension_numbers<[1], [0], [0], [1], [0, 0, 1, 1], [], []>} : vector<16x8xbf16>, vector<8x32xbf16>, vector<16x32xf32> -> vector<16x32xf32>
    %61 = arith.addf %34, %60 : vector<16x32xf32>
    %62 = vector.extract_strided_slice %6 {offsets = [0, 16], sizes = [16, 8], strides = [1, 1]} : vector<16x96xf32> to vector<16x8xf32>
    %63 = vector.extract_strided_slice %6 {offsets = [0, 48], sizes = [16, 8], strides = [1, 1]} : vector<16x96xf32> to vector<16x8xf32>
    %64 = vector.extract_strided_slice %6 {offsets = [0, 80], sizes = [16, 8], strides = [1, 1]} : vector<16x96xf32> to vector<16x8xf32>
    %65 = vector.shape_cast %62 : vector<16x8xf32> to vector<2x8x8xf32>
    %66 = arith.truncf %65 : vector<2x8x8xf32> to vector<2x8x8xbf16>
    %67 = vector.shape_cast %63 : vector<16x8xf32> to vector<2x8x8xf32>
    %68 = arith.truncf %67 : vector<2x8x8xf32> to vector<2x8x8xbf16>
    %69 = vector.shape_cast %64 : vector<16x8xf32> to vector<2x8x8xf32>
    %70 = arith.truncf %69 : vector<2x8x8xf32> to vector<2x8x8xbf16>
    "tpu.trace_start"() <{level = 10 : i32, message = "bqd,bkd->bqk"}> : () -> ()
    %cst_18 = arith.constant dense<0.000000e+00> : vector<2x8x8xf32>
    %71 = tpu.matmul %66, %68, %cst_18 {dimension_numbers = #tpu.dot_dimension_numbers<[2], [2], [1], [1], [0, 0, 0, 1, 1, 1], [0], [0]>} : vector<2x8x8xbf16>, vector<2x8x8xbf16>, vector<2x8x8xf32> -> vector<2x8x8xf32>
    "tpu.trace_stop"() : () -> ()
    %cst_19 = arith.constant dense<0xFF800000> : vector<2x8xf32>
    %72 = vector.multi_reduction <maximumf>, %71, %cst_19 [2] : vector<2x8x8xf32> to vector<2x8xf32>
    %73 = vector.shape_cast %72 : vector<2x8xf32> to vector<2x8x1xf32>
    %74 = vector.broadcast %73 : vector<2x8x1xf32> to vector<2x8x8xf32>
    %75 = arith.subf %71, %74 : vector<2x8x8xf32>
    %76 = math.exp %75 : vector<2x8x8xf32>
    %cst_20 = arith.constant dense<0.000000e+00> : vector<2x8xf32>
    %77 = vector.multi_reduction <add>, %76, %cst_20 [2] : vector<2x8x8xf32> to vector<2x8xf32>
    %78 = vector.shape_cast %77 : vector<2x8xf32> to vector<2x8x1xf32>
    %79 = tpu.reciprocal %78 {approx = true} : vector<2x8x1xf32> -> vector<2x8x1xf32>
    %80 = vector.broadcast %79 : vector<2x8x1xf32> to vector<2x8x8xf32>
    %81 = arith.mulf %76, %80 : vector<2x8x8xf32>
    %82 = arith.truncf %81 : vector<2x8x8xf32> to vector<2x8x8xbf16>
    "tpu.trace_start"() <{level = 10 : i32, message = "bqk,bkd->bqd"}> : () -> ()
    %cst_21 = arith.constant dense<0.000000e+00> : vector<2x8x8xf32>
    %83 = tpu.matmul %82, %70, %cst_21 {dimension_numbers = #tpu.dot_dimension_numbers<[2], [1], [1], [2], [0, 0, 0, 1, 1, 2], [0], [0]>} : vector<2x8x8xbf16>, vector<2x8x8xbf16>, vector<2x8x8xf32> -> vector<2x8x8xf32>
    "tpu.trace_stop"() : () -> ()
    %84 = vector.shape_cast %83 : vector<2x8x8xf32> to vector<16x8xf32>
    %85 = arith.truncf %84 : vector<16x8xf32> to vector<16x8xbf16>
    %86 = vector.extract_strided_slice %2 {offsets = [16, 0], sizes = [8, 32], strides = [1, 1]} : vector<32x32xbf16> to vector<8x32xbf16>
    %cst_22 = arith.constant dense<0.000000e+00> : vector<16x32xf32>
    %87 = tpu.matmul %85, %86, %cst_22 {dimension_numbers = #tpu.dot_dimension_numbers<[1], [0], [0], [1], [0, 0, 1, 1], [], []>} : vector<16x8xbf16>, vector<8x32xbf16>, vector<16x32xf32> -> vector<16x32xf32>
    %88 = arith.addf %61, %87 : vector<16x32xf32>
    %89 = vector.extract_strided_slice %6 {offsets = [0, 24], sizes = [16, 8], strides = [1, 1]} : vector<16x96xf32> to vector<16x8xf32>
    %90 = vector.extract_strided_slice %6 {offsets = [0, 56], sizes = [16, 8], strides = [1, 1]} : vector<16x96xf32> to vector<16x8xf32>
    %91 = vector.extract_strided_slice %6 {offsets = [0, 88], sizes = [16, 8], strides = [1, 1]} : vector<16x96xf32> to vector<16x8xf32>
    %92 = vector.shape_cast %89 : vector<16x8xf32> to vector<2x8x8xf32>
    %93 = arith.truncf %92 : vector<2x8x8xf32> to vector<2x8x8xbf16>
    %94 = vector.shape_cast %90 : vector<16x8xf32> to vector<2x8x8xf32>
    %95 = arith.truncf %94 : vector<2x8x8xf32> to vector<2x8x8xbf16>
    %96 = vector.shape_cast %91 : vector<16x8xf32> to vector<2x8x8xf32>
    %97 = arith.truncf %96 : vector<2x8x8xf32> to vector<2x8x8xbf16>
    "tpu.trace_start"() <{level = 10 : i32, message = "bqd,bkd->bqk"}> : () -> ()
    %cst_23 = arith.constant dense<0.000000e+00> : vector<2x8x8xf32>
    %98 = tpu.matmul %93, %95, %cst_23 {dimension_numbers = #tpu.dot_dimension_numbers<[2], [2], [1], [1], [0, 0, 0, 1, 1, 1], [0], [0]>} : vector<2x8x8xbf16>, vector<2x8x8xbf16>, vector<2x8x8xf32> -> vector<2x8x8xf32>
    "tpu.trace_stop"() : () -> ()
    %cst_24 = arith.constant dense<0xFF800000> : vector<2x8xf32>
    %99 = vector.multi_reduction <maximumf>, %98, %cst_24 [2] : vector<2x8x8xf32> to vector<2x8xf32>
    %100 = vector.shape_cast %99 : vector<2x8xf32> to vector<2x8x1xf32>
    %101 = vector.broadcast %100 : vector<2x8x1xf32> to vector<2x8x8xf32>
    %102 = arith.subf %98, %101 : vector<2x8x8xf32>
    %103 = math.exp %102 : vector<2x8x8xf32>
    %cst_25 = arith.constant dense<0.000000e+00> : vector<2x8xf32>
    %104 = vector.multi_reduction <add>, %103, %cst_25 [2] : vector<2x8x8xf32> to vector<2x8xf32>
    %105 = vector.shape_cast %104 : vector<2x8xf32> to vector<2x8x1xf32>
    %106 = tpu.reciprocal %105 {approx = true} : vector<2x8x1xf32> -> vector<2x8x1xf32>
    %107 = vector.broadcast %106 : vector<2x8x1xf32> to vector<2x8x8xf32>
    %108 = arith.mulf %103, %107 : vector<2x8x8xf32>
    %109 = arith.truncf %108 : vector<2x8x8xf32> to vector<2x8x8xbf16>
    "tpu.trace_start"() <{level = 10 : i32, message = "bqk,bkd->bqd"}> : () -> ()
    %cst_26 = arith.constant dense<0.000000e+00> : vector<2x8x8xf32>
    %110 = tpu.matmul %109, %97, %cst_26 {dimension_numbers = #tpu.dot_dimension_numbers<[2], [1], [1], [2], [0, 0, 0, 1, 1, 2], [0], [0]>} : vector<2x8x8xbf16>, vector<2x8x8xbf16>, vector<2x8x8xf32> -> vector<2x8x8xf32>
    "tpu.trace_stop"() : () -> ()
    %111 = vector.shape_cast %110 : vector<2x8x8xf32> to vector<16x8xf32>
    %112 = arith.truncf %111 : vector<16x8xf32> to vector<16x8xbf16>
    %113 = vector.extract_strided_slice %2 {offsets = [24, 0], sizes = [8, 32], strides = [1, 1]} : vector<32x32xbf16> to vector<8x32xbf16>
    %cst_27 = arith.constant dense<0.000000e+00> : vector<16x32xf32>
    %114 = tpu.matmul %112, %113, %cst_27 {dimension_numbers = #tpu.dot_dimension_numbers<[1], [0], [0], [1], [0, 0, 1, 1], [], []>} : vector<16x8xbf16>, vector<8x32xbf16>, vector<16x32xf32> -> vector<16x32xf32>
    %115 = arith.addf %88, %114 : vector<16x32xf32>
    %c0_28 = arith.constant 0 : index
    %c0_29 = arith.constant 0 : index
    %116 = vector.load %arg5[%c0_28, %c0_29] : memref<1x32xf32, #tpu.memory_space<vmem>>, vector<1x32xf32>
    %117 = vector.broadcast %116 : vector<1x32xf32> to vector<16x32xf32>
    %118 = arith.addf %115, %117 : vector<16x32xf32>
    %c0_30 = arith.constant 0 : index
    %c0_31 = arith.constant 0 : index
    %119 = vector.load %arg6[%c0_30, %c0_31] : memref<16x32xf32, #tpu.memory_space<vmem>>, vector<16x32xf32>
    tpu.vector_store %arg6[%c0_30, %c0_31], %118 {strides = array<i32>} : memref<16x32xf32, #tpu.memory_space<vmem>>, vector<16x32xf32>,
    return
  }
  func.func @transform_0(%arg0: i32) -> (i32, i32) {
    %c0_i32 = arith.constant 0 : i32
    %c0_i32_0 = arith.constant 0 : i32
    return %arg0, %c0_i32 : i32, i32
  }
  func.func @transform_1(%arg0: i32) -> (i32, i32) {
    %c0_i32 = arith.constant 0 : i32
    %c0_i32_0 = arith.constant 0 : i32
    %c0_i32_1 = arith.constant 0 : i32
    return %c0_i32, %c0_i32_0 : i32, i32
  }
  func.func @transform_2(%arg0: i32) -> (i32, i32) {
    %c0_i32 = arith.constant 0 : i32
    %c0_i32_0 = arith.constant 0 : i32
    %c0_i32_1 = arith.constant 0 : i32
    return %c0_i32, %c0_i32_0 : i32, i32
  }
  func.func @transform_3(%arg0: i32) -> (i32, i32) {
    %c0_i32 = arith.constant 0 : i32
    %c0_i32_0 = arith.constant 0 : i32
    %c0_i32_1 = arith.constant 0 : i32
    return %c0_i32, %c0_i32_0 : i32, i32
  }
  func.func @transform_4(%arg0: i32) -> (i32, i32) {
    %c0_i32 = arith.constant 0 : i32
    %c0_i32_0 = arith.constant 0 : i32
    %c0_i32_1 = arith.constant 0 : i32
    return %c0_i32, %c0_i32_0 : i32, i32
  }
  func.func @transform_5(%arg0: i32) -> (i32, i32) {
    %c0_i32 = arith.constant 0 : i32
    %c0_i32_0 = arith.constant 0 : i32
    return %arg0, %c0_i32 : i32, i32
  }
}

</mosaic_0001>

<llo_original>
// kernel: tpu_custom_call.1
$region0: #{tpu_custom_call.1}
  #allocation0 [shape = 'u32[]', space=smem, size = 0x4, offset = 0x4, fixed_abs, tag = 'smem constant byte address 0x4 - core index']
  #allocation1 [shape = 'u32[72,128]{1,0:T(1,128)}', space=vmem, size = 0x9000, scoped, tag = 'internal scratch']
  %s0 = inlined_call_operand.hbm [shape: bf16[16,32], index: 0, kind: input, shape index: {}]
  %s1 = inlined_call_operand.hbm [shape: bf16[32,96], index: 1, kind: input, shape index: {}]
  %s2 = inlined_call_operand.vmem [shape: f32[1,96], index: 2, kind: input, shape index: {}]
  %s3 = inlined_call_operand.hbm [shape: bf16[32,32], index: 3, kind: input, shape index: {}]
  %s4 = inlined_call_operand.vmem [shape: f32[1,32], index: 4, kind: input, shape index: {}]
  %s5 = inlined_call_operand.hbm [shape: f32[16,32], index: 5, kind: output, shape index: {}]
  %s6 = sld [smem:[#allocation0]]
  $region42: #{tpu_custom_call.1} parent=0
    _
  %s8 = ssub.s32 1, %s6
  %s9 = scalar_select 0, %s8, %s6
  $region1: #{tpu_custom_call.1} parent=0
    #allocation2 [shape = 'u8[4096]{0}', space=vmem, size = 0x1000, scoped, tag = 'input window, operand 0, single buffered']
    #allocation3 [shape = 's32[1]{0}', space=sflag, size = 0x4, scoped, tag = 'scoped memory for tpu_custom_call.1']
    #allocation4 [shape = 's32[1]{0}', space=sflag, size = 0x4, scoped, tag = 'scoped memory for tpu_custom_call.1']
    #allocation5 [shape = 'u8[8192]{0}', space=vmem, size = 0x2000, scoped, tag = 'input window, operand 1, single buffered']
    #allocation6 [shape = 's32[1]{0}', space=sflag, size = 0x4, scoped, tag = 'scoped memory for tpu_custom_call.1']
    #allocation7 [shape = 'u8[8192]{0}', space=vmem, size = 0x2000, scoped, tag = 'input window, operand 3, single buffered']
    #allocation8 [shape = 'u8[8192]{0}', space=vmem, size = 0x2000, scoped, tag = 'output window, operand 0, single buffered']
    %10 = vsyncpa [#allocation3], 0
    %11 = vsyncpa [#allocation6], 0
    %12 = vsyncpa [#allocation4], 0
    // Predicated region
    $region2: #{tpu_custom_call.1} parent=1 // pred_check
      _
    $region3: #{tpu_custom_call.1} parent=1 // pred_check_branch
      %14 = sbr.rel (0) target = $region5
    $region4: #{tpu_custom_call.1} parent=1 // pred_region
      %16 = vsyncadd [#allocation3], 0
      %s17 = sshll.u32 %s0, 4
      %s18 = int_to_ptr.hbm [resolvable:$true] %s17
      %s19 = sshll.u32 [#allocation2], 4
      %s20 = int_to_ptr.vmem [resolvable:$true] %s19
      %25 = dma.hbm_to_vmem [thread:$0]  %s18, 128, %s20, [#allocation3], 64, 64, 4
    $region5: #{tpu_custom_call.1} parent=1 // pred_fallthru
      _
    // Predicated region
    $region6: #{tpu_custom_call.1} parent=1 // pred_check
      _
    $region7: #{tpu_custom_call.1} parent=1 // pred_check_branch
      %27 = sbr.rel (0) target = $region9
    $region8: #{tpu_custom_call.1} parent=1 // pred_region
      %29 = vsyncadd [#allocation6], 0
      %s30 = sshll.u32 %s1, 4
      %s31 = int_to_ptr.hbm [resolvable:$true] %s30
      %s32 = sshll.u32 [#allocation5], 4
      %s33 = int_to_ptr.vmem [resolvable:$true] %s32
      %38 = dma.hbm_to_vmem [thread:$0]  %s31, 256, %s33, [#allocation6], 64, 64, 4
    $region9: #{tpu_custom_call.1} parent=1 // pred_fallthru
      _
    // Predicated region
    $region10: #{tpu_custom_call.1} parent=1 // pred_check
      _
    $region11: #{tpu_custom_call.1} parent=1 // pred_check_branch
      %40 = sbr.rel (0) target = $region13
    $region12: #{tpu_custom_call.1} parent=1 // pred_region
      _
    $region13: #{tpu_custom_call.1} parent=1 // pred_fallthru
      _
    // Predicated region
    $region14: #{tpu_custom_call.1} parent=1 // pred_check
      _
    $region15: #{tpu_custom_call.1} parent=1 // pred_check_branch
      %42 = sbr.rel (0) target = $region17
    $region16: #{tpu_custom_call.1} parent=1 // pred_region
      %44 = vsyncadd [#allocation6], 0
      %s45 = sshll.u32 %s3, 4
      %s46 = int_to_ptr.hbm [resolvable:$true] %s45
      %s47 = sshll.u32 [#allocation7], 4
      %s48 = int_to_ptr.vmem [resolvable:$true] %s47
      %53 = dma.hbm_to_vmem [thread:$0]  %s46, 256, %s48, [#allocation6], 64, 64, 4
    $region17: #{tpu_custom_call.1} parent=1 // pred_fallthru
      _
    // Predicated region
    $region18: #{tpu_custom_call.1} parent=1 // pred_check
      _
    $region19: #{tpu_custom_call.1} parent=1 // pred_check_branch
      %55 = sbr.rel (0) target = $region21
    $region20: #{tpu_custom_call.1} parent=1 // pred_region
      _
    $region21: #{tpu_custom_call.1} parent=1 // pred_fallthru
      _
    // Predicated region
    $region22: #{tpu_custom_call.1} parent=1 // pred_check
      _
    $region23: #{tpu_custom_call.1} parent=1 // pred_check_branch
      %57 = sbr.rel (0) target = $region25
    $region24: #{tpu_custom_call.1} parent=1 // pred_region
      %59 = dma.done [#allocation3], 128
    $region25: #{tpu_custom_call.1} parent=1 // pred_fallthru
      _
    // Predicated region
    $region26: #{tpu_custom_call.1} parent=1 // pred_check
      _
    $region27: #{tpu_custom_call.1} parent=1 // pred_check_branch
      %61 = sbr.rel (0) target = $region29
    $region28: #{tpu_custom_call.1} parent=1 // pred_region
      %63 = dma.done [#allocation6], 256
    $region29: #{tpu_custom_call.1} parent=1 // pred_fallthru
      _
    // Predicated region
    $region30: #{tpu_custom_call.1} parent=1 // pred_check
      _
    $region31: #{tpu_custom_call.1} parent=1 // pred_check_branch
      %65 = sbr.rel (0) target = $region33
    $region32: #{tpu_custom_call.1} parent=1 // pred_region
      %67 = dma.done [#allocation6], 256
    $region33: #{tpu_custom_call.1} parent=1 // pred_fallthru
      _
    %v69 = vld [vmem:[#allocation2] sm:$0xf]
    %v70 = vld [vmem:[#allocation2 + $0x4] sm:$0xf]
    %v71 = vld [vmem:[#allocation5] sm:$0xf]
    %v72 = vld [vmem:[#allocation5 + $0x4] sm:$0xf]
    %v73 = vld [vmem:[#allocation5 + $0x8] sm:$0xf]
    %v74 = vld [vmem:[#allocation5 + $0xc] sm:$0xf]
    %v75 = vld [vmem:[#allocation7] sm:$0xf]
    %v76 = vld [vmem:[#allocation7 + $0x4] sm:$0xf]
    %v77 = vld [vmem:[#allocation7 + $0x8] sm:$0xf]
    %v78 = vld [vmem:[#allocation7 + $0xc] sm:$0xf]
    %v79 = vld [vmem:[%s2] sm:$0x1]
    %v81 = vperm.slane %v79, 0
    %v85 = vunpack.c.l.b16 %v69
    %v86 = vunpack.c.l.b16 %v70
    %v87 = vpack.c.b16 %v86, %v85
    %v92 = vunpack.c.l.b16 %v71
    %v93 = vunpack.c.l.b16 %v72
    %v94 = vunpack.c.l.b16 %v73
    %v95 = vunpack.c.l.b16 %v74
    %v96 = vpack.c.b16 %v93, %v92
    %v97 = vpack.c.b16 %v95, %v94
    %vm100 = vcmask 261120
    %v102 = vsel %vm100, %v87, 0
    %104 = vmatpush.bf16.msra.mxu0 0
    %105 = vmatpush.bf16.msra.mxu0 0
    %106 = vmatpush.bf16.msra.mxu0 0
    %107 = vmatpush.bf16.msra.mxu0 0
    %108 = vmatpush.bf16.msra.mxu0 0
    %109 = vmatpush.bf16.msra.mxu0 0
    %110 = vmatpush.bf16.msra.mxu0 %v97
    %111 = vmatpush.bf16.msra.mxu0 %v96
    %112 = vmatmul.bf16.gmra.mxu0 %v102
    %v113 = vpop.f32.mrf.mxu0
    %v114 = vadd.f32 %v81, %v113
    %v115 = vpop.f32.mrf.mxu0
    %v116 = vadd.f32 %v81, %v115
    %117 = vdwg.mxu0
    %v118 = vpack.c.bf16 %v114, %v114
    %v119 = vpack.c.bf16 %v116, %v116
    %v121 = vunpack.c.l.b16 %v118
    %v122 = vpack.c.b16 %v121, %v121
    %123 = vrot.lane.b32.xlu0 %v122, 96
    %v124 = vpop.permute.xlu0 %123
    %vm125 = vcmask 64512
    %v127 = vsel %vm125, %v118, 0
    %v130 = vsel %vm125, %v124, 0
    %132 = vmatpush.bf16.xpose.msra.mxu0 0
    %133 = vmatpush.bf16.xpose.msra.mxu0 0
    %134 = vmatpush.bf16.xpose.msra.mxu0 0
    %135 = vmatpush.bf16.xpose.msra.mxu0 0
    %136 = vmatpush.bf16.xpose.msra.mxu0 0
    %137 = vmatpush.bf16.xpose.msra.mxu0 0
    %138 = vmatpush.bf16.xpose.msra.mxu0 0
    %139 = vmatpush.bf16.xpose.msra.mxu0 %v130
    %140 = vmatmul.bf16.gmra.mxu0 %v127
    %v141 = vpop.f32.mrf.mxu0
    %v142 = vadd.f32 0.0, %v141
    %v143 = vpop.f32.mrf.mxu0
    %144 = vdwg.mxu0
    %v146 = vunpack.c.l.b16 %v119
    %v147 = vpack.c.b16 %v146, %v146
    %148 = vrot.lane.b32.xlu0 %v147, 96
    %v149 = vpop.permute.xlu0 %148
    %v151 = vsel %vm125, %v119, 0
    %v154 = vsel %vm125, %v149, 0
    %156 = vmatpush.bf16.xpose.msra.mxu0 0
    %157 = vmatpush.bf16.xpose.msra.mxu0 0
    %158 = vmatpush.bf16.xpose.msra.mxu0 0
    %159 = vmatpush.bf16.xpose.msra.mxu0 0
    %160 = vmatpush.bf16.xpose.msra.mxu0 0
    %161 = vmatpush.bf16.xpose.msra.mxu0 0
    %162 = vmatpush.bf16.xpose.msra.mxu0 0
    %163 = vmatpush.bf16.xpose.msra.mxu0 %v154
    %164 = vmatmul.bf16.gmra.mxu0 %v151
    %v165 = vpop.f32.mrf.mxu0
    %v166 = vadd.f32 0.0, %v165
    %v167 = vpop.f32.mrf.mxu0
    %168 = vdwg.mxu0
    %v169 = vsel %vm125, %v142, -inf
    %170 = vmax.xlane.f32.xlu0 %v169
    %v171 = vpop.xlane.xlu0 %170
    %v172 = vsel %vm125, %v166, -inf
    %173 = vmax.xlane.f32.xlu0 %v172
    %v174 = vpop.xlane.xlu0 %173
    %v175 = vsub.f32 %v142, %v171
    %v176 = vsub.f32 %v166, %v174
    %v177 = vmul.f32 %v175, 1.442695
    %v178 = vpow.pop %v177
    %v179 = vmul.f32 %v176, 1.442695
    %v180 = vpow.pop %v179
    %v181 = vsel %vm125, %v178, 0.0
    %182 = vadd.xlane.f32.xlu0 %v181
    %v183 = vpop.xlane.xlu0 %182
    %v184 = vsel %vm125, %v180, 0.0
    %185 = vadd.xlane.f32.xlu0 %v184
    %v186 = vpop.xlane.xlu0 %185
    %v187 = vrcp.pop %v183
    %v188 = vrcp.pop %v186
    %v189 = vmul.f32 %v178, %v187
    %v190 = vmul.f32 %v180, %v188
    %v191 = vpack.c.bf16 %v189, %v189
    %v192 = vpack.c.bf16 %v190, %v190
    %193 = vrot.lane.b32.xlu0 %v122, 64
    %v194 = vpop.permute.xlu0 %193
    %v196 = vsel %vm125, %v191, 0
    %vm198 = vcmask 1043456
    %v200 = vsel %vm198, %v194, 0
    %202 = vmatpush.bf16.msra.mxu0 0
    %203 = vmatpush.bf16.msra.mxu0 0
    %204 = vmatpush.bf16.msra.mxu0 0
    %205 = vmatpush.bf16.msra.mxu0 0
    %206 = vmatpush.bf16.msra.mxu0 0
    %207 = vmatpush.bf16.msra.mxu0 0
    %208 = vmatpush.bf16.msra.mxu0 0
    %209 = vmatpush.bf16.msra.mxu0 %v200
    %210 = vmatmul.bf16.gmra.mxu0 %v196
    %v211 = vpop.f32.mrf.mxu0
    %v212 = vadd.f32 0.0, %v211
    %v213 = vpop.f32.mrf.mxu0
    %214 = vdwg.mxu0
    %215 = vrot.lane.b32.xlu0 %v147, 64
    %v216 = vpop.permute.xlu0 %215
    %v218 = vsel %vm125, %v192, 0
    %v221 = vsel %vm198, %v216, 0
    %223 = vmatpush.bf16.msra.mxu0 0
    %224 = vmatpush.bf16.msra.mxu0 0
    %225 = vmatpush.bf16.msra.mxu0 0
    %226 = vmatpush.bf16.msra.mxu0 0
    %227 = vmatpush.bf16.msra.mxu0 0
    %228 = vmatpush.bf16.msra.mxu0 0
    %229 = vmatpush.bf16.msra.mxu0 0
    %230 = vmatpush.bf16.msra.mxu0 %v221
    %231 = vmatmul.bf16.gmra.mxu0 %v218
    %v232 = vpop.f32.mrf.mxu0
    %v233 = vadd.f32 0.0, %v232
    %v234 = vpop.f32.mrf.mxu0
    %235 = vdwg.mxu0
    %v236 = vpack.c.bf16 %v233, %v212
    %237 = vrot.lane.b32.xlu0 %v122, 120
    %v238 = vpop.permute.xlu0 %237
    %239 = vrot.lane.b32.xlu0 %v122, 88
    %v240 = vpop.permute.xlu0 %239
    %v242 = vsel %vm125, %v238, 0
    %v245 = vsel %vm125, %v240, 0
    %247 = vmatpush.bf16.xpose.msra.mxu0 0
    %248 = vmatpush.bf16.xpose.msra.mxu0 0
    %249 = vmatpush.bf16.xpose.msra.mxu0 0
    %250 = vmatpush.bf16.xpose.msra.mxu0 0
    %251 = vmatpush.bf16.xpose.msra.mxu0 0
    %252 = vmatpush.bf16.xpose.msra.mxu0 0
    %253 = vmatpush.bf16.xpose.msra.mxu0 0
    %254 = vmatpush.bf16.xpose.msra.mxu0 %v245
    %255 = vmatmul.bf16.gmra.mxu0 %v242
    %v256 = vpop.f32.mrf.mxu0
    %v257 = vadd.f32 0.0, %v256
    %v258 = vpop.f32.mrf.mxu0
    %259 = vdwg.mxu0
    %260 = vrot.lane.b32.xlu0 %v147, 120
    %v261 = vpop.permute.xlu0 %260
    %262 = vrot.lane.b32.xlu0 %v147, 88
    %v263 = vpop.permute.xlu0 %262
    %v265 = vsel %vm125, %v261, 0
    %v268 = vsel %vm125, %v263, 0
    %270 = vmatpush.bf16.xpose.msra.mxu0 0
    %271 = vmatpush.bf16.xpose.msra.mxu0 0
    %272 = vmatpush.bf16.xpose.msra.mxu0 0
    %273 = vmatpush.bf16.xpose.msra.mxu0 0
    %274 = vmatpush.bf16.xpose.msra.mxu0 0
    %275 = vmatpush.bf16.xpose.msra.mxu0 0
    %276 = vmatpush.bf16.xpose.msra.mxu0 0
    %277 = vmatpush.bf16.xpose.msra.mxu0 %v268
    %278 = vmatmul.bf16.gmra.mxu0 %v265
    %v279 = vpop.f32.mrf.mxu0
    %v280 = vadd.f32 0.0, %v279
    %v281 = vpop.f32.mrf.mxu0
    %282 = vdwg.mxu0
    %v283 = vsel %vm125, %v257, -inf
    %284 = vmax.xlane.f32.xlu0 %v283
    %v285 = vpop.xlane.xlu0 %284
    %v286 = vsel %vm125, %v280, -inf
    %287 = vmax.xlane.f32.xlu0 %v286
    %v288 = vpop.xlane.xlu0 %287
    %v289 = vsub.f32 %v257, %v285
    %v290 = vsub.f32 %v280, %v288
    %v291 = vmul.f32 %v289, 1.442695
    %v292 = vpow.pop %v291
    %v293 = vmul.f32 %v290, 1.442695
    %v294 = vpow.pop %v293
    %v295 = vsel %vm125, %v292, 0.0
    %296 = vadd.xlane.f32.xlu0 %v295
    %v297 = vpop.xlane.xlu0 %296
    %v298 = vsel %vm125, %v294, 0.0
    %299 = vadd.xlane.f32.xlu0 %v298
    %v300 = vpop.xlane.xlu0 %299
    %v301 = vrcp.pop %v297
    %v302 = vrcp.pop %v300
    %v303 = vmul.f32 %v292, %v301
    %v304 = vmul.f32 %v294, %v302
    %v305 = vpack.c.bf16 %v303, %v303
    %v306 = vpack.c.bf16 %v304, %v304
    %307 = vrot.lane.b32.xlu0 %v122, 56
    %v308 = vpop.permute.xlu0 %307
    %v310 = vsel %vm125, %v305, 0
    %v313 = vsel %vm198, %v308, 0
    %315 = vmatpush.bf16.msra.mxu0 0
    %316 = vmatpush.bf16.msra.mxu0 0
    %317 = vmatpush.bf16.msra.mxu0 0
    %318 = vmatpush.bf16.msra.mxu0 0
    %319 = vmatpush.bf16.msra.mxu0 0
    %320 = vmatpush.bf16.msra.mxu0 0
    %321 = vmatpush.bf16.msra.mxu0 0
    %322 = vmatpush.bf16.msra.mxu0 %v313
    %323 = vmatmul.bf16.gmra.mxu0 %v310
    %v324 = vpop.f32.mrf.mxu0
    %v325 = vadd.f32 0.0, %v324
    %v326 = vpop.f32.mrf.mxu0
    %327 = vdwg.mxu0
    %328 = vrot.lane.b32.xlu0 %v147, 56
    %v329 = vpop.permute.xlu0 %328
    %v331 = vsel %vm125, %v306, 0
    %v334 = vsel %vm198, %v329, 0
    %336 = vmatpush.bf16.msra.mxu0 0
    %337 = vmatpush.bf16.msra.mxu0 0
    %338 = vmatpush.bf16.msra.mxu0 0
    %339 = vmatpush.bf16.msra.mxu0 0
    %340 = vmatpush.bf16.msra.mxu0 0
    %341 = vmatpush.bf16.msra.mxu0 0
    %342 = vmatpush.bf16.msra.mxu0 0
    %343 = vmatpush.bf16.msra.mxu0 %v334
    %344 = vmatmul.bf16.gmra.mxu0 %v331
    %v345 = vpop.f32.mrf.mxu0
    %v346 = vadd.f32 0.0, %v345
    %v347 = vpop.f32.mrf.mxu0
    %348 = vdwg.mxu0
    %v349 = vpack.c.bf16 %v346, %v325
    %v351 = vsel %vm125, %v349, 0
    %v354 = vsel %vm198, %v76, 0
    %356 = vmatpush.bf16.msra.mxu0 0
    %357 = vmatpush.bf16.msra.mxu0 0
    %358 = vmatpush.bf16.msra.mxu0 0
    %359 = vmatpush.bf16.msra.mxu0 0
    %360 = vmatpush.bf16.msra.mxu0 0
    %361 = vmatpush.bf16.msra.mxu0 0
    %362 = vmatpush.bf16.msra.mxu0 0
    %363 = vmatpush.bf16.msra.mxu0 %v354
    %364 = vmatmul.bf16.gmra.mxu0 %v351
    %v365 = vpop.f32.mrf.mxu0
    %v366 = vadd.f32 0.0, %v365
    %v367 = vpop.f32.mrf.mxu0
    %v368 = vadd.f32 0.0, %v367
    %369 = vdwg.mxu0
    %v371 = vsel %vm125, %v236, 0
    %v374 = vsel %vm198, %v75, 0
    %376 = vmatpush.bf16.msra.mxu0 0
    %377 = vmatpush.bf16.msra.mxu0 0
    %378 = vmatpush.bf16.msra.mxu0 0
    %379 = vmatpush.bf16.msra.mxu0 0
    %380 = vmatpush.bf16.msra.mxu0 0
    %381 = vmatpush.bf16.msra.mxu0 0
    %382 = vmatpush.bf16.msra.mxu0 0
    %383 = vmatpush.bf16.msra.mxu0 %v374
    %384 = vmatmul.bf16.gmra.mxu0 %v371
    %v385 = vpop.f32.mrf.mxu0
    %v386 = vadd.f32 %v366, %v385
    %v387 = vpop.f32.mrf.mxu0
    %v388 = vadd.f32 %v368, %v387
    %389 = vdwg.mxu0
    %390 = vrot.lane.b32.xlu0 %v122, 112
    %v391 = vpop.permute.xlu0 %390
    %392 = vrot.lane.b32.xlu0 %v122, 80
    %v393 = vpop.permute.xlu0 %392
    %v395 = vsel %vm125, %v391, 0
    %v398 = vsel %vm125, %v393, 0
    %400 = vmatpush.bf16.xpose.msra.mxu0 0
    %401 = vmatpush.bf16.xpose.msra.mxu0 0
    %402 = vmatpush.bf16.xpose.msra.mxu0 0
    %403 = vmatpush.bf16.xpose.msra.mxu0 0
    %404 = vmatpush.bf16.xpose.msra.mxu0 0
    %405 = vmatpush.bf16.xpose.msra.mxu0 0
    %406 = vmatpush.bf16.xpose.msra.mxu0 0
    %407 = vmatpush.bf16.xpose.msra.mxu0 %v398
    %408 = vmatmul.bf16.gmra.mxu0 %v395
    %v409 = vpop.f32.mrf.mxu0
    %v410 = vadd.f32 0.0, %v409
    %v411 = vpop.f32.mrf.mxu0
    %412 = vdwg.mxu0
    %413 = vrot.lane.b32.xlu0 %v147, 112
    %v414 = vpop.permute.xlu0 %413
    %415 = vrot.lane.b32.xlu0 %v147, 80
    %v416 = vpop.permute.xlu0 %415
    %v418 = vsel %vm125, %v414, 0
    %v421 = vsel %vm125, %v416, 0
    %423 = vmatpush.bf16.xpose.msra.mxu0 0
    %424 = vmatpush.bf16.xpose.msra.mxu0 0
    %425 = vmatpush.bf16.xpose.msra.mxu0 0
    %426 = vmatpush.bf16.xpose.msra.mxu0 0
    %427 = vmatpush.bf16.xpose.msra.mxu0 0
    %428 = vmatpush.bf16.xpose.msra.mxu0 0
    %429 = vmatpush.bf16.xpose.msra.mxu0 0
    %430 = vmatpush.bf16.xpose.msra.mxu0 %v421
    %431 = vmatmul.bf16.gmra.mxu0 %v418
    %v432 = vpop.f32.mrf.mxu0
    %v433 = vadd.f32 0.0, %v432
    %v434 = vpop.f32.mrf.mxu0
    %435 = vdwg.mxu0
    %v436 = vsel %vm125, %v410, -inf
    %437 = vmax.xlane.f32.xlu0 %v436
    %v438 = vpop.xlane.xlu0 %437
    %v439 = vsel %vm125, %v433, -inf
    %440 = vmax.xlane.f32.xlu0 %v439
    %v441 = vpop.xlane.xlu0 %440
    %v442 = vsub.f32 %v410, %v438
    %v443 = vsub.f32 %v433, %v441
    %v444 = vmul.f32 %v442, 1.442695
    %v445 = vpow.pop %v444
    %v446 = vmul.f32 %v443, 1.442695
    %v447 = vpow.pop %v446
    %v448 = vsel %vm125, %v445, 0.0
    %449 = vadd.xlane.f32.xlu0 %v448
    %v450 = vpop.xlane.xlu0 %449
    %v451 = vsel %vm125, %v447, 0.0
    %452 = vadd.xlane.f32.xlu0 %v451
    %v453 = vpop.xlane.xlu0 %452
    %v454 = vrcp.pop %v450
    %v455 = vrcp.pop %v453
    %v456 = vmul.f32 %v445, %v454
    %v457 = vmul.f32 %v447, %v455
    %v458 = vpack.c.bf16 %v456, %v456
    %v459 = vpack.c.bf16 %v457, %v457
    %460 = vrot.lane.b32.xlu0 %v122, 48
    %v461 = vpop.permute.xlu0 %460
    %v463 = vsel %vm125, %v458, 0
    %v466 = vsel %vm198, %v461, 0
    %468 = vmatpush.bf16.msra.mxu0 0
    %469 = vmatpush.bf16.msra.mxu0 0
    %470 = vmatpush.bf16.msra.mxu0 0
    %471 = vmatpush.bf16.msra.mxu0 0
    %472 = vmatpush.bf16.msra.mxu0 0
    %473 = vmatpush.bf16.msra.mxu0 0
    %474 = vmatpush.bf16.msra.mxu0 0
    %475 = vmatpush.bf16.msra.mxu0 %v466
    %476 = vmatmul.bf16.gmra.mxu0 %v463
    %v477 = vpop.f32.mrf.mxu0
    %v478 = vadd.f32 0.0, %v477
    %v479 = vpop.f32.mrf.mxu0
    %480 = vdwg.mxu0
    %481 = vrot.lane.b32.xlu0 %v147, 48
    %v482 = vpop.permute.xlu0 %481
    %v484 = vsel %vm125, %v459, 0
    %v487 = vsel %vm198, %v482, 0
    %489 = vmatpush.bf16.msra.mxu0 0
    %490 = vmatpush.bf16.msra.mxu0 0
    %491 = vmatpush.bf16.msra.mxu0 0
    %492 = vmatpush.bf16.msra.mxu0 0
    %493 = vmatpush.bf16.msra.mxu0 0
    %494 = vmatpush.bf16.msra.mxu0 0
    %495 = vmatpush.bf16.msra.mxu0 0
    %496 = vmatpush.bf16.msra.mxu0 %v487
    %497 = vmatmul.bf16.gmra.mxu0 %v484
    %v498 = vpop.f32.mrf.mxu0
    %v499 = vadd.f32 0.0, %v498
    %v500 = vpop.f32.mrf.mxu0
    %501 = vdwg.mxu0
    %v502 = vpack.c.bf16 %v499, %v478
    %v504 = vsel %vm125, %v502, 0
    %v507 = vsel %vm198, %v77, 0
    %509 = vmatpush.bf16.msra.mxu0 0
    %510 = vmatpush.bf16.msra.mxu0 0
    %511 = vmatpush.bf16.msra.mxu0 0
    %512 = vmatpush.bf16.msra.mxu0 0
    %513 = vmatpush.bf16.msra.mxu0 0
    %514 = vmatpush.bf16.msra.mxu0 0
    %515 = vmatpush.bf16.msra.mxu0 0
    %516 = vmatpush.bf16.msra.mxu0 %v507
    %517 = vmatmul.bf16.gmra.mxu0 %v504
    %v518 = vpop.f32.mrf.mxu0
    %v519 = vadd.f32 0.0, %v518
    %v520 = vpop.f32.mrf.mxu0
    %v521 = vadd.f32 0.0, %v520
    %522 = vdwg.mxu0
    %v523 = vadd.f32 %v386, %v519
    %v524 = vadd.f32 %v388, %v521
    %525 = vrot.lane.b32.xlu0 %v122, 104
    %v526 = vpop.permute.xlu0 %525
    %527 = vrot.lane.b32.xlu0 %v122, 72
    %v528 = vpop.permute.xlu0 %527
    %v530 = vsel %vm125, %v526, 0
    %v533 = vsel %vm125, %v528, 0
    %535 = vmatpush.bf16.xpose.msra.mxu0 0
    %536 = vmatpush.bf16.xpose.msra.mxu0 0
    %537 = vmatpush.bf16.xpose.msra.mxu0 0
    %538 = vmatpush.bf16.xpose.msra.mxu0 0
    %539 = vmatpush.bf16.xpose.msra.mxu0 0
    %540 = vmatpush.bf16.xpose.msra.mxu0 0
    %541 = vmatpush.bf16.xpose.msra.mxu0 0
    %542 = vmatpush.bf16.xpose.msra.mxu0 %v533
    %543 = vmatmul.bf16.gmra.mxu0 %v530
    %v544 = vpop.f32.mrf.mxu0
    %v545 = vadd.f32 0.0, %v544
    %v546 = vpop.f32.mrf.mxu0
    %547 = vdwg.mxu0
    %548 = vrot.lane.b32.xlu0 %v147, 104
    %v549 = vpop.permute.xlu0 %548
    %550 = vrot.lane.b32.xlu0 %v147, 72
    %v551 = vpop.permute.xlu0 %550
    %v553 = vsel %vm125, %v549, 0
    %v556 = vsel %vm125, %v551, 0
    %558 = vmatpush.bf16.xpose.msra.mxu0 0
    %559 = vmatpush.bf16.xpose.msra.mxu0 0
    %560 = vmatpush.bf16.xpose.msra.mxu0 0
    %561 = vmatpush.bf16.xpose.msra.mxu0 0
    %562 = vmatpush.bf16.xpose.msra.mxu0 0
    %563 = vmatpush.bf16.xpose.msra.mxu0 0
    %564 = vmatpush.bf16.xpose.msra.mxu0 0
    %565 = vmatpush.bf16.xpose.msra.mxu0 %v556
    %566 = vmatmul.bf16.gmra.mxu0 %v553
    %v567 = vpop.f32.mrf.mxu0
    %v568 = vadd.f32 0.0, %v567
    %v569 = vpop.f32.mrf.mxu0
    %570 = vdwg.mxu0
    %v571 = vsel %vm125, %v545, -inf
    %572 = vmax.xlane.f32.xlu0 %v571
    %v573 = vpop.xlane.xlu0 %572
    %v574 = vsel %vm125, %v568, -inf
    %575 = vmax.xlane.f32.xlu0 %v574
    %v576 = vpop.xlane.xlu0 %575
    %v577 = vsub.f32 %v545, %v573
    %v578 = vsub.f32 %v568, %v576
    %v579 = vmul.f32 %v577, 1.442695
    %v580 = vpow.pop %v579
    %v581 = vmul.f32 %v578, 1.442695
    %v582 = vpow.pop %v581
    %v583 = vsel %vm125, %v580, 0.0
    %584 = vadd.xlane.f32.xlu0 %v583
    %v585 = vpop.xlane.xlu0 %584
    %v586 = vsel %vm125, %v582, 0.0
    %587 = vadd.xlane.f32.xlu0 %v586
    %v588 = vpop.xlane.xlu0 %587
    %v589 = vrcp.pop %v585
    %v590 = vrcp.pop %v588
    %v591 = vmul.f32 %v580, %v589
    %v592 = vmul.f32 %v582, %v590
    %v593 = vpack.c.bf16 %v591, %v591
    %v594 = vpack.c.bf16 %v592, %v592
    %595 = vrot.lane.b32.xlu0 %v122, 40
    %v596 = vpop.permute.xlu0 %595
    %v598 = vsel %vm125, %v593, 0
    %v601 = vsel %vm198, %v596, 0
    %603 = vmatpush.bf16.msra.mxu0 0
    %604 = vmatpush.bf16.msra.mxu0 0
    %605 = vmatpush.bf16.msra.mxu0 0
    %606 = vmatpush.bf16.msra.mxu0 0
    %607 = vmatpush.bf16.msra.mxu0 0
    %608 = vmatpush.bf16.msra.mxu0 0
    %609 = vmatpush.bf16.msra.mxu0 0
    %610 = vmatpush.bf16.msra.mxu0 %v601
    %611 = vmatmul.bf16.gmra.mxu0 %v598
    %v612 = vpop.f32.mrf.mxu0
    %v613 = vadd.f32 0.0, %v612
    %v614 = vpop.f32.mrf.mxu0
    %615 = vdwg.mxu0
    %616 = vrot.lane.b32.xlu0 %v147, 40
    %v617 = vpop.permute.xlu0 %616
    %v619 = vsel %vm125, %v594, 0
    %v622 = vsel %vm198, %v617, 0
    %624 = vmatpush.bf16.msra.mxu0 0
    %625 = vmatpush.bf16.msra.mxu0 0
    %626 = vmatpush.bf16.msra.mxu0 0
    %627 = vmatpush.bf16.msra.mxu0 0
    %628 = vmatpush.bf16.msra.mxu0 0
    %629 = vmatpush.bf16.msra.mxu0 0
    %630 = vmatpush.bf16.msra.mxu0 0
    %631 = vmatpush.bf16.msra.mxu0 %v622
    %632 = vmatmul.bf16.gmra.mxu0 %v619
    %v633 = vpop.f32.mrf.mxu0
    %v634 = vadd.f32 0.0, %v633
    %v635 = vpop.f32.mrf.mxu0
    %636 = vdwg.mxu0
    %v637 = vpack.c.bf16 %v634, %v613
    %v639 = vsel %vm125, %v637, 0
    %v642 = vsel %vm198, %v78, 0
    %644 = vmatpush.bf16.msra.mxu0 0
    %645 = vmatpush.bf16.msra.mxu0 0
    %646 = vmatpush.bf16.msra.mxu0 0
    %647 = vmatpush.bf16.msra.mxu0 0
    %648 = vmatpush.bf16.msra.mxu0 0
    %649 = vmatpush.bf16.msra.mxu0 0
    %650 = vmatpush.bf16.msra.mxu0 0
    %651 = vmatpush.bf16.msra.mxu0 %v642
    %652 = vmatmul.bf16.gmra.mxu0 %v639
    %v653 = vpop.f32.mrf.mxu0
    %v654 = vadd.f32 0.0, %v653
    %v655 = vpop.f32.mrf.mxu0
    %v656 = vadd.f32 0.0, %v655
    %657 = vdwg.mxu0
    %v658 = vadd.f32 %v523, %v654
    %v659 = vadd.f32 %v524, %v656
    %v660 = vld [vmem:[%s4] sm:$0x1]
    %v662 = vperm.slane %v660, 0
    %v664 = vadd.f32 %v658, %v662
    %v665 = vadd.f32 %v659, %v662
    %666 = vst.msk [vmem:[#allocation8] sm:$0xff] %vm100, %v664
    %667 = vst.msk [vmem:[#allocation8 + $0x8] sm:$0xff] %vm100, %v665
    // Predicated region
    $region34: #{tpu_custom_call.1} parent=1 // pred_check
      _
    $region35: #{tpu_custom_call.1} parent=1 // pred_check_branch
      %669 = sbr.rel (0) target = $region37
    $region36: #{tpu_custom_call.1} parent=1 // pred_region
      %671 = vsyncadd [#allocation4], 0
      %s672 = sshll.u32 [#allocation8], 4
      %s673 = int_to_ptr.vmem [resolvable:$true] %s672
      %s674 = sshll.u32 %s5, 4
      %s675 = int_to_ptr.hbm [resolvable:$true] %s674
      %680 = dma.vmem_to_hbm [thread:$0]  %s673, 256, %s675, [#allocation4], 128, 128, 8
    $region37: #{tpu_custom_call.1} parent=1 // pred_fallthru
      _
    // Predicated region
    $region38: #{tpu_custom_call.1} parent=1 // pred_check
      _
    $region39: #{tpu_custom_call.1} parent=1 // pred_check_branch
      %682 = sbr.rel (0) target = $region41
    $region40: #{tpu_custom_call.1} parent=1 // pred_region
      %684 = dma.done [#allocation4], 256
    $region41: #{tpu_custom_call.1} parent=1 // pred_fallthru
      _
    %685 = vsyncpa [#allocation3], 1
    %686 = vsyncpa [#allocation6], 1
    %687 = vsyncpa [#allocation4], 1

</llo_original>
